<compile_context>
chip_gen: v5e
topology: v5e:2x2
jax: 0.10.0
libtpu: 0.0.40
codegen_flags: <defaults>
</compile_context>

<pallas_src>
import functools

import jax
import jax.numpy as jnp
from jax.experimental import pallas as pl
from jax.experimental.pallas import tpu as pltpu


def _round_up(a, b):
    return ((a + b - 1) // b) * b


def _encoder_kernel(r, w_ref, xc_ref, *rest):
    """One (batch, K-tile) grid step.

    w_ref  : [N, L_pad]        folded conv weight (bf16), L_pad = r*stride
    xc_ref : [1, stride, TK]   polyphase signal, current K tile (f32)
    xn_ref : [1, stride, HALO] narrow halo (next HALO frames), only if r > 1
    out_ref: [1, N, TK]        output block, PyTorch [B, N, K] layout
    """
    if r > 1:
        xn_ref, out_ref = rest
    else:
        (out_ref,) = rest

    xc = xc_ref[0]                                    # [stride, TK]
    if r == 1:
        frames_t = xc
    else:
        xn = xn_ref[0]                                # [stride, HALO]
        pieces = [xc]
        # TODO(synk): for large r = ceil(L/stride) replace the misaligned
        # concats below with pltpu.roll + lane-mask merge (XLU instead of VPU).
        for j in range(1, r):
            # piece_j[s, t] = xp[s, tile_start + t + j]
            pieces.append(jnp.concatenate([xc[:, j:], xn[:, :j]], axis=1))
        # frames_t[j*stride + s, t] = x[(tile_start + t)*stride + j*stride + s]
        frames_t = jnp.concatenate(pieces, axis=0)    # [L_pad, TK]

    acc = jnp.dot(w_ref[...], frames_t.astype(jnp.bfloat16),
                  preferred_element_type=jnp.float32)  # [N, TK], f32 acc
    out_ref[0] = jnp.maximum(acc, 0.0).astype(out_ref.dtype)


def encoder_forward(x, conv_w, pw_ws, kernel_size, stride,
                    out_dtype=jnp.bfloat16):
    """Pallas implementation of Encoder.forward (attention=False).

    x      : [B, 1, T]            (PyTorch NCT layout)
    conv_w : [N, 1, L]            (first Conv1d weight, bias=False)
    pw_ws  : list of [N, N, 1]    (1x1 conv weights for layer_num > 1)
    returns: [B, N, K],  K = (T - L)//stride + 1, dtype = out_dtype
    """
    B, C, T = x.shape
    assert C == 1, "Encoder expects a single input channel"
    N = conv_w.shape[0]
    L = kernel_size
    K = (T - L) // stride + 1
    assert K >= 1

    # ---- fold all (no-activation) conv layers into one [L, N] matrix ------
    w_eff = conv_w[:, 0, :].T.astype(jnp.float32)                  # [L, N]
    for w in pw_ws:
        w_eff = jnp.dot(w_eff, w[:, :, 0].T,
                        precision=jax.lax.Precision.HIGHEST)       # [L, N]

    # Pad L up to a multiple of stride; padded weight rows are zero.
    r = -(-L // stride)                       # ceil(L / stride)
    L_pad = r * stride
    w_eff = jnp.pad(w_eff, ((0, L_pad - L), (0, 0)))               # [L_pad, N]
    w_eff_t = w_eff.T.astype(jnp.bfloat16)                         # [N, L_pad]

    # ---- tiling over output frames (lane-dense K tiles) --------------------
    HALO = _round_up(r, 128) if r > 1 else 0  # narrow halo: only r-1 frames needed
    align = max(128, HALO)
    TK = min(max(2048, align), _round_up(K, align))
    # Prefer a tile that divides K exactly -> no K padding and no post-kernel
    # full-tensor slice copy of the padded output.
    if K % align == 0 and K % TK != 0:
        for cand in range(TK - align, align - 1, -align):
            if K % cand == 0:
                TK = cand
                break
    n_kt = pl.cdiv(K, TK)
    K_pad = n_kt * TK

    # ---- duplication-free polyphase layout: xp[b, s, m] = x[b, 0, m*stride+s]
    Kq_pad = max(K_pad + HALO, -(-T // stride))
    T_pad = Kq_pad * stride
    x_flat = jnp.pad(x[:, 0, :].astype(jnp.float32), ((0, 0), (0, T_pad - T)))
    xp = x_flat.reshape(B, Kq_pad, stride).transpose(0, 2, 1)      # [B, stride, Kq_pad]

    in_specs = [
        # Folded weight: constant block index -> fetched once.
        pl.BlockSpec((N, L_pad), lambda b, kt: (0, 0)),
        # Current K tile of the polyphase signal.
        pl.BlockSpec((1, stride, TK), lambda b, kt: (b, 0, kt)),
    ]
    args = [w_eff_t, xp]
    if r > 1:
        halo_blocks = TK // HALO  # TK is a multiple of HALO by construction
        in_specs.append(
            # Narrow halo: the first HALO frames of the *next* K tile.
            pl.BlockSpec((1, stride, HALO),
                         lambda b, kt: (b, 0, (kt + 1) * halo_blocks)))
        args.append(xp)

    kernel = functools.partial(_encoder_kernel, r)
    out = pl.pallas_call(
        kernel,
        out_shape=jax.ShapeDtypeStruct((B, N, K_pad), out_dtype),
        grid=(B, n_kt),
        in_specs=in_specs,
        out_specs=pl.BlockSpec((1, N, TK), lambda b, kt: (b, 0, kt)),
        compiler_params=pltpu.CompilerParams(
            dimension_semantics=("parallel", "parallel")),
    )(*args)

    if K_pad != K:
        # Note: this slice re-copies the dominant [B, N, K] tensor in HBM;
        # consumers that can handle a K_pad-wide (zero-padded) output should
        # take `out` directly (or fuse this slice under their jit).
        out = out[:, :, :K]
    return out


def encoder_reference(x, conv_w, pw_ws, stride):
    """Pure-JAX fp32 reference (mirrors torch F.conv1d chain + relu)."""
    out = jax.lax.conv_general_dilated(
        x, conv_w, window_strides=(stride,), padding="VALID",
        dimension_numbers=("NCH", "OIH", "NCH"),
        precision=jax.lax.Precision.HIGHEST)
    for w in pw_ws:
        out = jax.lax.conv_general_dilated(
            out, w, window_strides=(1,), padding="VALID",
            dimension_numbers=("NCH", "OIH", "NCH"),
            precision=jax.lax.Precision.HIGHEST)
    return jnp.maximum(out, 0.0)


if __name__ == "__main__":
    # Encoder(out_chan=32, kernel_size=16, stride=8, layer_num=2) — small shapes.
    B, T = 2, 72
    out_chan, kernel_size, stride = 32, 16, 8
    layer_num = 2        # exercises the folded 1x1-conv path
    # (attention=False — the module default; attention branch not exercised)

    key = jax.random.PRNGKey(0)
    kx, kw0, kw1 = jax.random.split(key, 3)

    x = jax.random.normal(kx, (B, 1, T), dtype=jnp.float32)
    conv_w = 0.1 * jax.random.normal(
        kw0, (out_chan, 1, kernel_size), dtype=jnp.float32)
    pw_ws = []
    kws = jax.random.split(kw1, max(layer_num - 1, 1))
    for i in range(layer_num - 1):
        pw_ws.append(0.1 * jax.random.normal(
            kws[i], (out_chan, out_chan, 1), dtype=jnp.float32))

    out = encoder_forward(x, conv_w, pw_ws, kernel_size, stride)
    out = jax.block_until_ready(out)

    ref = encoder_reference(x, conv_w, pw_ws, stride)
    assert out.shape == ref.shape, (out.shape, ref.shape)
    # bf16 MXU operands + bf16 output store -> relaxed (bf16-level) tolerance.
    max_err = float(jnp.max(jnp.abs(out.astype(jnp.float32) - ref)))
    assert max_err < 2e-2, max_err

    print("KERNEL_OK")
</pallas_src>

<mosaic_0001>
module attributes {stable_mosaic.version = 11 : i64} {
  func.func @_encoder_kernel(%arg0: i32, %arg1: i32, %arg2: memref<32x16xbf16, #tpu.memory_space<vmem>>, %arg3: memref<1x8x128xf32, #tpu.memory_space<vmem>>, %arg4: memref<1x8x128xf32, #tpu.memory_space<vmem>>, %arg5: memref<1x32x128xbf16, #tpu.memory_space<vmem>>) attributes {dimension_semantics = [#tpu.dimension_semantics<parallel>, #tpu.dimension_semantics<parallel>], iteration_bounds = array<i64: 2, 1>, scalar_prefetch = 0 : i64, scratch_operands = 0 : i64, tpu.core_type = #tpu.core_type<tc>, window_params = [{pipeline_mode = #tpu.pipeline_mode<synchronous>, transform_indices = @transform_0, window_bounds = array<i64: 32, 16>}, {transform_indices = @transform_1, window_bounds = array<i64: 1, 8, 128>}, {transform_indices = @transform_2, window_bounds = array<i64: 1, 8, 128>}, {transform_indices = @transform_3, window_bounds = array<i64: 1, 32, 128>}]} {
    %c0 = arith.constant 0 : index
    %c0_0 = arith.constant 0 : index
    %c0_1 = arith.constant 0 : index
    %0 = vector.load %arg3[%c0, %c0_0, %c0_1] : memref<1x8x128xf32, #tpu.memory_space<vmem>>, vector<1x8x128xf32>
    %1 = vector.shape_cast %0 : vector<1x8x128xf32> to vector<8x128xf32>
    %c0_2 = arith.constant 0 : index
    %c0_3 = arith.constant 0 : index
    %c0_4 = arith.constant 0 : index
    %2 = vector.load %arg4[%c0_2, %c0_3, %c0_4] : memref<1x8x128xf32, #tpu.memory_space<vmem>>, vector<1x8x128xf32>
    %3 = vector.shape_cast %2 : vector<1x8x128xf32> to vector<8x128xf32>
    %4 = vector.extract_strided_slice %1 {offsets = [0, 1], sizes = [8, 127], strides = [1, 1]} : vector<8x128xf32> to vector<8x127xf32>
    %5 = vector.extract_strided_slice %3 {offsets = [0, 0], sizes = [8, 1], strides = [1, 1]} : vector<8x128xf32> to vector<8x1xf32>
    %6 = tpu.concatenate %4, %5 in 1 : vector<8x127xf32>, vector<8x1xf32> -> vector<8x128xf32>
    %7 = tpu.concatenate %1, %6 in 0 : vector<8x128xf32>, vector<8x128xf32> -> vector<16x128xf32>
    %c0_5 = arith.constant 0 : index
    %c0_6 = arith.constant 0 : index
    %8 = vector.load %arg2[%c0_5, %c0_6] : memref<32x16xbf16, #tpu.memory_space<vmem>>, vector<32x16xbf16>
    %9 = arith.truncf %7 : vector<16x128xf32> to vector<16x128xbf16>
    %cst = arith.constant dense<0.000000e+00> : vector<32x128xf32>
    %10 = tpu.matmul %8, %9, %cst {dimension_numbers = #tpu.dot_dimension_numbers<[1], [0], [0], [1], [0, 0, 1, 1], [], []>} : vector<32x16xbf16>, vector<16x128xbf16>, vector<32x128xf32> -> vector<32x128xf32>
    %cst_7 = arith.constant 0.000000e+00 : f32
    %11 = vector.broadcast %cst_7 : f32 to vector<32x128xf32>
    %12 = arith.maximumf %10, %11 : vector<32x128xf32>
    %13 = arith.truncf %12 : vector<32x128xf32> to vector<32x128xbf16>
    %c0_8 = arith.constant 0 : index
    %c0_9 = arith.constant 0 : index
    %c0_10 = arith.constant 0 : index
    %14 = vector.load %arg5[%c0_8, %c0_9, %c0_10] : memref<1x32x128xbf16, #tpu.memory_space<vmem>>, vector<1x32x128xbf16>
    %15 = vector.shape_cast %14 : vector<1x32x128xbf16> to vector<32x128xbf16>
    %16 = vector.shape_cast %13 : vector<32x128xbf16> to vector<1x32x128xbf16>
    tpu.vector_store %arg5[%c0_8, %c0_9, %c0_10], %16 {strides = array<i32>} : memref<1x32x128xbf16, #tpu.memory_space<vmem>>, vector<1x32x128xbf16>,
    return
  }
  func.func @transform_0(%arg0: i32, %arg1: i32) -> (i32, i32) {
    %c0_i32 = arith.constant 0 : i32
    %c0_i32_0 = arith.constant 0 : i32
    %c0_i32_1 = arith.constant 0 : i32
    return %c0_i32, %c0_i32_0 : i32, i32
  }
  func.func @transform_1(%arg0: i32, %arg1: i32) -> (i32, i32, i32) {
    %c0_i32 = arith.constant 0 : i32
    %c0_i32_0 = arith.constant 0 : i32
    return %arg0, %c0_i32, %arg1 : i32, i32, i32
  }
  func.func @transform_2(%arg0: i32, %arg1: i32) -> (i32, i32, i32) {
    %c1_i32 = arith.constant 1 : i32
    %0 = arith.addi %arg1, %c1_i32 : i32
    %c1_i32_0 = arith.constant 1 : i32
    %1 = arith.muli %0, %c1_i32_0 : i32
    %c0_i32 = arith.constant 0 : i32
    %c0_i32_1 = arith.constant 0 : i32
    return %arg0, %c0_i32, %1 : i32, i32, i32
  }
  func.func @transform_3(%arg0: i32, %arg1: i32) -> (i32, i32, i32) {
    %c0_i32 = arith.constant 0 : i32
    %c0_i32_0 = arith.constant 0 : i32
    return %arg0, %c0_i32, %arg1 : i32, i32, i32
  }
}

</mosaic_0001>

<llo_original>
// kernel: tpu_custom_call.1
$region0: #{tpu_custom_call.1}
  #allocation0 [shape = 'u32[]', space=smem, size = 0x4, offset = 0x4, fixed_abs, tag = 'smem constant byte address 0x4 - core index']
  #allocation1 [shape = 'u32[72,128]{1,0:T(1,128)}', space=vmem, size = 0x9000, scoped, tag = 'internal scratch']
  %s0 = inlined_call_operand.vmem [shape: bf16[32,16], index: 0, kind: input, shape index: {}]
  %s1 = inlined_call_operand.hbm [shape: f32[2,8,256], index: 1, kind: input, shape index: {}]
  %s2 = inlined_call_operand.hbm [shape: f32[2,8,256], index: 2, kind: input, shape index: {}]
  %s3 = inlined_call_operand.hbm [shape: bf16[2,32,128], index: 3, kind: output, shape index: {}]
  %s4 = sld [smem:[#allocation0]]
  $region53: #{tpu_custom_call.1} parent=0
    _
  %s6 = ssub.s32 1, %s4
  %s7 = scalar_select 0, %s6, %s4
  $region1: #{tpu_custom_call.1} parent=0
    #allocation2 [shape = 'u8[8192]{0}', space=vmem, size = 0x2000, scoped, tag = 'input window, operand 1']
    #allocation3 [shape = 's32[2]{0}', space=sflag, size = 0x8, scoped, tag = 'scoped memory for tpu_custom_call.1']
    #allocation4 [shape = 's32[2]{0}', space=sflag, size = 0x8, scoped, tag = 'scoped memory for tpu_custom_call.1']
    #allocation5 [shape = 'u8[8192]{0}', space=vmem, size = 0x2000, scoped, tag = 'input window, operand 2']
    #allocation6 [shape = 's32[2]{0}', space=sflag, size = 0x8, scoped, tag = 'scoped memory for tpu_custom_call.1']
    #allocation7 [shape = 'u8[16384]{0}', space=vmem, size = 0x4000, scoped, tag = 'output window, operand 0']
    %8 = vsyncpa [#allocation3], 0
    %s9 = scalar_lea.sflag [#allocation3], 1
    %10 = vsyncpa %s9, 0
    %11 = vsyncpa [#allocation6], 0
    %s12 = scalar_lea.sflag [#allocation6], 1
    %13 = vsyncpa %s12, 0
    %14 = vsyncpa [#allocation4], 0
    %s15 = scalar_lea.sflag [#allocation4], 1
    %16 = vsyncpa %s15, 0
    loop: start=0, step=1, limit=4
    $region2: #{tpu_custom_call.1} parent=1 // loop_pre_header
      _
    $region3: #{tpu_custom_call.1} parent=1 // loop_header
      %s18 = sphi 0, %s22
      %p19 = scmp.ge.s32.totalorder %s18, 4
      %s25 = sphi 0, %s37
      %s26 = sphi 0, %s33
      %s27 = sphi 0, %s25
      %s28 = sphi 0, %s26
      %s29 = sphi 0, %s27
      %s30 = sphi 0, %s28
      %s38 = sphi 0, %s38
      %s40 = sphi 0, %s38
      %s41 = sphi 0, %s40
      %s55 = sphi 0, %s41
      %s63 = sphi 0, %s65
      %s66 = sphi 0, %s63
      %s67 = sphi 0, %s66
      %s83 = sphi 0, %s67
      %s93 = sphi 0, %s95
      %s96 = sphi 0, %s93
      %s97 = sphi 0, %s96
      %s113 = sphi 0, %s97
      %s121 = sphi 0, %s123
      %s124 = sphi 0, %s121
      %s125 = sphi 0, %s124
      %s141 = sphi 0, %s125
    $region4: #{tpu_custom_call.1} parent=1 // loop_header_branch
      %21 = sbr.rel (%p19) target = $region8
    $region5: #{tpu_custom_call.1} parent=1 // loop_body
      %s23 = ssub.s32 %s18, 1
      %s24 = ssub.s32 %s18, 2
      %s31 = sadd.s32 1, %s26
      %p32 = scmp.ge.s32.totalorder %s31, 1
      %s33 = scalar_select %p32, 0, %s31
      %s34 = sadd.s32 1, %s25
      %s35 = scalar_select %p32, %s34, %s25
      %p36 = scmp.ge.s32.totalorder %s35, 2
      %s37 = scalar_select %p36, 0, %s35
      %s39 = sadd.s32 %s38, 1
      %p42 = scmp.eq.s32.totalorder %s18, 1
      %p43 = scmp.ne.s32.totalorder %s38, %s40
      %p44 = scmp.eq.s32.totalorder %s18, 0
      %p45 = por %p43, %p44
      %p46 = scmp.ne.s32.totalorder %s38, %s40
      %p47 = scmp.eq.s32.totalorder %s23, 1
      %p48 = por %p46, %p47
      %p49 = scmp.ne.s32.totalorder %s40, %s41
      %p50 = scmp.eq.s32.totalorder %s23, 0
      %p51 = por %p49, %p50
      %p52 = scmp.ne.s32.totalorder %s40, %s41
      %p53 = scmp.eq.s32.totalorder %s24, 1
      %p54 = por %p52, %p53
      %p56 = scmp.ne.s32.totalorder %s41, %s55
      %p57 = scmp.eq.s32.totalorder %s24, 0
      %p58 = por %p56, %p57
      %s59 = ssub.s32 %s25, %s37
      %s60 = ssub.s32 %s26, %s33
      %s61 = sor.u32 %s59, %s60
      %p62 = scmp.eq.s32.totalorder %s61, 0
      %s64 = sadd.s32 %s63, 1
      %s65 = scalar_select %p62, %s63, %s64
      %p68 = pneg %p62
      %p69 = scmp.eq.s32.totalorder %s18, 1
      %p70 = por %p68, %p69
      %p71 = scmp.ne.s32.totalorder %s63, %s66
      %p72 = scmp.eq.s32.totalorder %s18, 0
      %p73 = por %p71, %p72
      %p74 = scmp.ne.s32.totalorder %s63, %s66
      %p75 = scmp.eq.s32.totalorder %s23, 1
      %p76 = por %p74, %p75
      %p77 = scmp.ne.s32.totalorder %s66, %s67
      %p78 = scmp.eq.s32.totalorder %s23, 0
      %p79 = por %p77, %p78
      %p80 = scmp.ne.s32.totalorder %s66, %s67
      %p81 = scmp.eq.s32.totalorder %s24, 1
      %p82 = por %p80, %p81
      %p84 = scmp.ne.s32.totalorder %s67, %s83
      %p85 = scmp.eq.s32.totalorder %s24, 0
      %p86 = por %p84, %p85
      %s87 = sadd.s32 %s26, 1
      %s88 = sadd.s32 %s33, 1
      %s89 = ssub.s32 %s25, %s37
      %s90 = ssub.s32 %s87, %s88
      %s91 = sor.u32 %s89, %s90
      %p92 = scmp.eq.s32.totalorder %s91, 0
      %s94 = sadd.s32 %s93, 1
      %s95 = scalar_select %p92, %s93, %s94
      %p98 = pneg %p92
      %p99 = scmp.eq.s32.totalorder %s18, 1
      %p100 = por %p98, %p99
      %p101 = scmp.ne.s32.totalorder %s93, %s96
      %p102 = scmp.eq.s32.totalorder %s18, 0
      %p103 = por %p101, %p102
      %p104 = scmp.ne.s32.totalorder %s93, %s96
      %p105 = scmp.eq.s32.totalorder %s23, 1
      %p106 = por %p104, %p105
      %p107 = scmp.ne.s32.totalorder %s96, %s97
      %p108 = scmp.eq.s32.totalorder %s23, 0
      %p109 = por %p107, %p108
      %p110 = scmp.ne.s32.totalorder %s96, %s97
      %p111 = scmp.eq.s32.totalorder %s24, 1
      %p112 = por %p110, %p111
      %p114 = scmp.ne.s32.totalorder %s97, %s113
      %p115 = scmp.eq.s32.totalorder %s24, 0
      %p116 = por %p114, %p115
      %s117 = ssub.s32 %s25, %s37
      %s118 = ssub.s32 %s26, %s33
      %s119 = sor.u32 %s117, %s118
      %p120 = scmp.eq.s32.totalorder %s119, 0
      %s122 = sadd.s32 %s121, 1
      %s123 = scalar_select %p120, %s121, %s122
      %p126 = pneg %p120
      %p127 = scmp.eq.s32.totalorder %s18, 1
      %p128 = por %p126, %p127
      %p129 = scmp.ne.s32.totalorder %s121, %s124
      %p130 = scmp.eq.s32.totalorder %s18, 0
      %p131 = por %p129, %p130
      %p132 = scmp.ne.s32.totalorder %s121, %s124
      %p133 = scmp.eq.s32.totalorder %s23, 1
      %p134 = por %p132, %p133
      %p135 = scmp.ne.s32.totalorder %s124, %s125
      %p136 = scmp.eq.s32.totalorder %s23, 0
      %p137 = por %p135, %p136
      %p138 = scmp.ne.s32.totalorder %s124, %s125
      %p139 = scmp.eq.s32.totalorder %s24, 1
      %p140 = por %p138, %p139
      %p142 = scmp.ne.s32.totalorder %s125, %s141
      %p143 = scmp.eq.s32.totalorder %s24, 0
      %p144 = por %p142, %p143
      %p145 = scmp.le.s32.totalorder 1, %s18
      %p146 = scmp.lt.s32.totalorder %s18, 3
      %p147 = pnand %p145, %p146
      %p148 = pneg %p147
      // Predicated region
      $region9: #{tpu_custom_call.1} parent=5 // pred_check
        _
      $region10: #{tpu_custom_call.1} parent=5 // pred_check_branch
        %150 = sbr.rel (%p147) target = $region12
      $region11: #{tpu_custom_call.1} parent=5 // pred_region
        %s151 = ssub.s32 %s18, 1
        // Predicated region
        $region13: #{tpu_custom_call.1} parent=11 // pred_check
          %p152 = pneg %p51
        $region14: #{tpu_custom_call.1} parent=11 // pred_check_branch
          %154 = sbr.rel (%p152) target = $region16
        $region15: #{tpu_custom_call.1} parent=11 // pred_region
          _
        $region16: #{tpu_custom_call.1} parent=11 // pred_fallthru
          _
      $region12: #{tpu_custom_call.1} parent=5 // pred_fallthru
        _
      %p155 = scmp.lt.s32.totalorder %s18, 2
      // Predicated region
      $region17: #{tpu_custom_call.1} parent=5 // pred_check
        %p156 = pneg %p155
      $region18: #{tpu_custom_call.1} parent=5 // pred_check_branch
        %158 = sbr.rel (%p156) target = $region20
      $region19: #{tpu_custom_call.1} parent=5 // pred_region
        // Predicated region
        $region21: #{tpu_custom_call.1} parent=19 // pred_check
          %p159 = pneg %p73
        $region22: #{tpu_custom_call.1} parent=19 // pred_check_branch
          %161 = sbr.rel (%p159) target = $region24
        $region23: #{tpu_custom_call.1} parent=19 // pred_region
          %s162 = sand.u32 %s63, 1
          %s163 = scalar_lea.sflag [#allocation3], %s162
          %s164 = sand.u32 %s63, 1
          %s165 = smul.addr %s164, 8
          %s166 = scalar_lea.vmem [#allocation2], %s165
          %168 = vsyncadd %s163, 0
          %s169 = smul.addr %s25, 2
          %s170 = sadd.s32 %s26, %s169
          %s171 = smul.addr %s170, 8
          %s172 = scalar_lea.hbm %s1, %s171
          %s174 = sshll.u32 %s172, 4
          %s175 = int_to_ptr.hbm [resolvable:$true] %s174
          %s176 = sshll.u32 %s166, 4
          %s177 = int_to_ptr.vmem [resolvable:$true] %s176
          %179 = dma.hbm_to_vmem [thread:$0]  %s175, 128, %s177, %s163
        $region24: #{tpu_custom_call.1} parent=19 // pred_fallthru
          _
        // Predicated region
        $region25: #{tpu_custom_call.1} parent=19 // pred_check
          %p180 = pneg %p103
        $region26: #{tpu_custom_call.1} parent=19 // pred_check_branch
          %182 = sbr.rel (%p180) target = $region28
        $region27: #{tpu_custom_call.1} parent=19 // pred_region
          %s183 = sand.u32 %s93, 1
          %s184 = scalar_lea.sflag [#allocation6], %s183
          %s185 = sand.u32 %s93, 1
          %s186 = smul.addr %s185, 8
          %s187 = scalar_lea.vmem [#allocation5], %s186
          %s188 = sadd.s32 %s26, 1
          %190 = vsyncadd %s184, 0
          %s191 = smul.addr %s25, 2
          %s192 = sadd.s32 %s188, %s191
          %s193 = smul.addr %s192, 8
          %s194 = scalar_lea.hbm %s2, %s193
          %s196 = sshll.u32 %s194, 4
          %s197 = int_to_ptr.hbm [resolvable:$true] %s196
          %s198 = sshll.u32 %s187, 4
          %s199 = int_to_ptr.vmem [resolvable:$true] %s198
          %201 = dma.hbm_to_vmem [thread:$0]  %s197, 128, %s199, %s184
        $region28: #{tpu_custom_call.1} parent=19 // pred_fallthru
          _
      $region20: #{tpu_custom_call.1} parent=5 // pred_fallthru
        _
      %p202 = scmp.le.s32.totalorder 1, %s18
      %p203 = scmp.lt.s32.totalorder %s18, 3
      %p204 = pnand %p202, %p203
      %p205 = pneg %p204
      // Predicated region
      $region29: #{tpu_custom_call.1} parent=5 // pred_check
        _
      $region30: #{tpu_custom_call.1} parent=5 // pred_check_branch
        %207 = sbr.rel (%p204) target = $region32
      $region31: #{tpu_custom_call.1} parent=5 // pred_region
        %s208 = ssub.s32 %s18, 1
        %s209 = sand.u32 %s66, 1
        %s210 = scalar_lea.sflag [#allocation3], %s209
        %s211 = sand.u32 %s66, 1
        %s212 = smul.addr %s211, 8
        %s213 = scalar_lea.vmem [#allocation2], %s212
        // Predicated region
        $region33: #{tpu_custom_call.1} parent=31 // pred_check
          %p214 = pneg %p79
        $region34: #{tpu_custom_call.1} parent=31 // pred_check_branch
          %216 = sbr.rel (%p214) target = $region36
        $region35: #{tpu_custom_call.1} parent=31 // pred_region
          %218 = dma.done %s210, 128
        $region36: #{tpu_custom_call.1} parent=31 // pred_fallthru
          _
        %s219 = sand.u32 %s96, 1
        %s220 = scalar_lea.sflag [#allocation6], %s219
        %s221 = sand.u32 %s96, 1
        %s222 = smul.addr %s221, 8
        %s223 = scalar_lea.vmem [#allocation5], %s222
        // Predicated region
        $region37: #{tpu_custom_call.1} parent=31 // pred_check
          %p224 = pneg %p109
        $region38: #{tpu_custom_call.1} parent=31 // pred_check_branch
          %226 = sbr.rel (%p224) target = $region40
        $region39: #{tpu_custom_call.1} parent=31 // pred_region
          %228 = dma.done %s220, 128
        $region40: #{tpu_custom_call.1} parent=31 // pred_fallthru
          _
        %p229 = pneg %p51
        %p230 = pneg %p48
        %s231 = sand.u32 %s66, 1
        %s232 = scalar_lea.sflag [#allocation3], %s231
        %s233 = sand.u32 %s66, 1
        %s234 = smul.addr %s233, 8
        %s235 = scalar_lea.vmem [#allocation2], %s234
        %p236 = pneg %p79
        %p237 = pneg %p76
        %s238 = sand.u32 %s96, 1
        %s239 = scalar_lea.sflag [#allocation6], %s238
        %s240 = sand.u32 %s96, 1
        %s241 = smul.addr %s240, 8
        %s242 = scalar_lea.vmem [#allocation5], %s241
        %p243 = pneg %p109
        %p244 = pneg %p106
        %p245 = pneg %p137
        %p246 = pneg %p134
        %s247 = sand.u32 %s124, 1
        %s248 = scalar_lea.sflag [#allocation4], %s247
        %s249 = sand.u32 %s124, 1
        %s250 = smul.addr %s249, 16
        %s251 = scalar_lea.vmem [#allocation7], %s250
        %s252 = sadd.s32 %s28, 1
        %v254 = vld [vmem:[%s213] sm:$0xff]
        %v255 = vld [vmem:[%s223] sm:$0xff]
        %257 = vrot.lane.b32.xlu0 %v254, 127
        %v258 = vpop.permute.xlu0 %257
        %261 = vrot.lane.b32.xlu0 %v255, 127
        %v262 = vpop.permute.xlu0 %261
        %vm264 = vcmask 1039360
        %v265 = vsel %vm264, %v258, %v262
        %v266 = vld [vmem:[%s0] sm:$0xf]
        %v267 = vld [vmem:[%s0 + $0x4] sm:$0xf]
        %v268 = vld [vmem:[%s0 + $0x8] sm:$0xf]
        %v269 = vld [vmem:[%s0 + $0xc] sm:$0xf]
        %v270 = vpack.c.bf16 %v265, %v254
        %v275 = vunpack.c.l.b16 %v266
        %v276 = vunpack.c.l.b16 %v267
        %v277 = vunpack.c.l.b16 %v268
        %v278 = vunpack.c.l.b16 %v269
        %v279 = vpack.c.b16 %v276, %v275
        %v280 = vpack.c.b16 %v278, %v277
        %vm281 = vcmask 130048
        %v283 = vsel %vm281, %v279, 0
        %v286 = vsel %vm281, %v280, 0
        %288 = vmatpush.bf16.msra.mxu0 0
        %289 = vmatpush.bf16.msra.mxu0 0
        %290 = vmatpush.bf16.msra.mxu0 0
        %291 = vmatpush.bf16.msra.mxu0 0
        %292 = vmatpush.bf16.msra.mxu0 0
        %293 = vmatpush.bf16.msra.mxu0 0
        %294 = vmatpush.bf16.msra.mxu0 0
        %295 = vmatpush.bf16.msra.mxu0 %v270
        %296 = vmatmul.bf16.gmra.mxu0 %v283
        %v297 = vpop.f32.mrf.mxu0
        %v298 = vadd.f32 0.0, %v297
        %v299 = vpop.f32.mrf.mxu0
        %v300 = vadd.f32 0.0, %v299
        %301 = vmatmul.bf16.gmra.mxu0 %v286
        %v302 = vpop.f32.mrf.mxu0
        %v303 = vadd.f32 0.0, %v302
        %v304 = vpop.f32.mrf.mxu0
        %v305 = vadd.f32 0.0, %v304
        %306 = vdwg.mxu0
        %v307 = vmax.f32 %v298, 0.0
        %v308 = vmax.f32 %v300, 0.0
        %v309 = vmax.f32 %v303, 0.0
        %v310 = vmax.f32 %v305, 0.0
        %v311 = vpack.c.bf16 %v307, %v307
        %v312 = vpack.c.bf16 %v308, %v308
        %v313 = vpack.c.bf16 %v309, %v309
        %v314 = vpack.c.bf16 %v310, %v310
        %315 = vst [vmem:[%s251] sm:$0xf] %v311
        %316 = vst [vmem:[%s251 + $0x4] sm:$0xf] %v312
        %317 = vst [vmem:[%s251 + $0x8] sm:$0xf] %v313
        %318 = vst [vmem:[%s251 + $0xc] sm:$0xf] %v314
        %s319 = sand.u32 %s124, 1
        %s320 = scalar_lea.sflag [#allocation4], %s319
        %s321 = sand.u32 %s124, 1
        %s322 = smul.addr %s321, 16
        %s323 = scalar_lea.vmem [#allocation7], %s322
        // Predicated region
        $region41: #{tpu_custom_call.1} parent=31 // pred_check
          %p324 = pneg %p134
        $region42: #{tpu_custom_call.1} parent=31 // pred_check_branch
          %326 = sbr.rel (%p324) target = $region44
        $region43: #{tpu_custom_call.1} parent=31 // pred_region
          %328 = vsyncadd %s320, 0
          %s329 = smul.addr %s27, 4
          %s330 = sadd.s32 %s28, %s329
          %s331 = smul.addr %s330, 4
          %s332 = scalar_lea.hbm %s3, %s331
          %s333 = sshll.u32 %s323, 4
          %s334 = int_to_ptr.vmem [resolvable:$true] %s333
          %s335 = sshll.u32 %s332, 4
          %s336 = int_to_ptr.hbm [resolvable:$true] %s335
          %341 = dma.vmem_to_hbm [thread:$0]  %s334, 256, %s336, %s320, 64, 64, 4
        $region44: #{tpu_custom_call.1} parent=31 // pred_fallthru
          _
      $region32: #{tpu_custom_call.1} parent=5 // pred_fallthru
        _
      %p342 = scmp.le.s32.totalorder 2, %s18
      // Predicated region
      $region45: #{tpu_custom_call.1} parent=5 // pred_check
        %p343 = pneg %p342
      $region46: #{tpu_custom_call.1} parent=5 // pred_check_branch
        %345 = sbr.rel (%p343) target = $region48
      $region47: #{tpu_custom_call.1} parent=5 // pred_region
        %s346 = ssub.s32 %s18, 2
        // Predicated region
        $region49: #{tpu_custom_call.1} parent=47 // pred_check
          %p347 = pneg %p140
        $region50: #{tpu_custom_call.1} parent=47 // pred_check_branch
          %349 = sbr.rel (%p347) target = $region52
        $region51: #{tpu_custom_call.1} parent=47 // pred_region
          %s350 = sand.u32 %s125, 1
          %s351 = scalar_lea.sflag [#allocation4], %s350
          %s352 = sand.u32 %s125, 1
          %s353 = smul.addr %s352, 16
          %s354 = scalar_lea.vmem [#allocation7], %s353
          %356 = dma.done %s351, 256
        $region52: #{tpu_custom_call.1} parent=47 // pred_fallthru
          _
      $region48: #{tpu_custom_call.1} parent=5 // pred_fallthru
        _
    $region6: #{tpu_custom_call.1} parent=1 // loop_footer
      %s22 = sadd.s32 1, %s18
    $region7: #{tpu_custom_call.1} parent=1 // loop_footer_branch
      %17 = sbr.rel target = $region3
    $region8: #{tpu_custom_call.1} parent=1 // loop_exit
      _
    %357 = vsyncpa [#allocation3], 1
    %s358 = scalar_lea.sflag [#allocation3], 1
    %359 = vsyncpa %s358, 1
    %360 = vsyncpa [#allocation6], 1
    %s361 = scalar_lea.sflag [#allocation6], 1
    %362 = vsyncpa %s361, 1
    %363 = vsyncpa [#allocation4], 1
    %s364 = scalar_lea.sflag [#allocation4], 1
    %365 = vsyncpa %s364, 1

</llo_original>
